<compile_context>
chip_gen: v7x
topology: tpu7x:2x2x1
jax: 0.10.0
libtpu: 0.0.40
codegen_flags: <defaults>
</compile_context>

<pallas_src>
import jax
import jax.numpy as jnp
from jax.experimental import pallas as pl
from jax.experimental.pallas import tpu as pltpu


# ----------------------------- Pallas kernel -------------------------------

def _categorical_net_kernel(x_ref, wt_ref, b_ref, probs_ref, logp_ref, mode_ref):
    # x_ref: (TILE_B, D)          wt_ref: (D, A_pad) bf16   b_ref: (1, A_pad) f32
    # probs_ref: (TILE_B, A_pad) bf16   logp_ref: (TILE_B, A_pad) f32
    # mode_ref:  (TILE_B, 1) int32
    x = x_ref[...].astype(jnp.bfloat16)                   # bf16 MXU operand
    logits = jnp.dot(x, wt_ref[...], preferred_element_type=jnp.float32)
    logits = logits + b_ref[...]                          # padded cols get -1e9

    # Numerically-stable softmax / log-softmax (f32 elementwise, v5e-safe).
    m = jnp.max(logits, axis=-1, keepdims=True)
    shifted = logits - m
    e = jnp.exp(shifted)
    denom = jnp.sum(e, axis=-1, keepdims=True)

    logp_ref[...] = shifted - jnp.log(denom)
    probs_ref[...] = (e * pl.reciprocal(denom, approx=True)).astype(jnp.bfloat16)

    # Fused mode: first column index attaining the row max (matches argmax).
    a_pad = logits.shape[-1]
    col = jax.lax.broadcasted_iota(jnp.int32, logits.shape, 1)
    cand = jnp.where(logits == m, col, a_pad)
    mode_ref[...] = jnp.min(cand, axis=-1, keepdims=True)


def categorical_net_forward(x, wt_bf16, bias_padded):
    """Fused linear + softmax + argmax.

    x:           (B, D) f32 or bf16 (bf16 input halves the x DMA stream)
    wt_bf16:     (D, A_pad) bf16   pre-transposed, zero-padded weight
    bias_padded: (1, A_pad) f32    0 for real columns, -1e9 for padding
    returns padded (probs_bf16, log_probs_f32, mode_i32) of shapes
            (b_pad, A_pad), (b_pad, A_pad), (b_pad, 1).
    """
    B, D = x.shape
    A_pad = wt_bf16.shape[1]
    itemsize_x = jnp.dtype(x.dtype).itemsize

    # ---- batch-tile selection (VMEM budgeted, megacore aware) ------------
    # Per-row bytes: double-buffered x tile + bf16 probs + f32 log_probs + mode.
    bytes_per_row = 2 * (D * itemsize_x + A_pad * 2 + A_pad * 4 + 4)
    fixed_bytes = D * A_pad * 2 + A_pad * 4          # single-buffered weight+bias
    vmem_budget = 40 * 1024 * 1024                   # fits v7x's 64 MiB physical
    rows_budget = max(
        8, ((vmem_budget - fixed_bytes) // max(bytes_per_row, 1)) // 8 * 8)

    rows8 = 8 * pl.cdiv(B, 8)                        # sublane-aligned batch
    tile_b = min(1024, rows8, rows_budget)
    # v7x has 2 TensorCores: give large batches at least 2 grid blocks so the
    # "parallel" axis can shard across both cores.
    if rows8 >= 256 and pl.cdiv(rows8, tile_b) < 2:
        tile_b = 8 * pl.cdiv(pl.cdiv(rows8, 2), 8)

    n_blocks = pl.cdiv(B, tile_b)
    b_pad = n_blocks * tile_b
    if b_pad != B:
        x = jnp.pad(x, ((0, b_pad - B), (0, 0)))     # padded rows -> harmless

    footprint = bytes_per_row * tile_b + fixed_bytes
    # Explicit limit: above v5e's 16 MiB scoped default, below v7x's 64 MiB
    # physical VMEM; generous headroom for compiler-internal scratch.
    vmem_limit = int(min(56 * 1024 * 1024,
                         max(32 * 1024 * 1024, footprint + (8 << 20))))

    out_shapes = (
        jax.ShapeDtypeStruct((b_pad, A_pad), jnp.bfloat16),  # probs (bf16)
        jax.ShapeDtypeStruct((b_pad, A_pad), jnp.float32),   # log_probs (f32)
        jax.ShapeDtypeStruct((b_pad, 1), jnp.int32),         # mode (argmax)
    )
    cost = pl.CostEstimate(
        flops=2 * b_pad * D * A_pad,
        transcendentals=2 * b_pad * A_pad,
        bytes_accessed=(b_pad * D * itemsize_x + D * A_pad * 2 + A_pad * 4
                        + b_pad * A_pad * (2 + 4) + b_pad * 4),
    )

    probs, logp, mode = pl.pallas_call(
        _categorical_net_kernel,
        out_shape=out_shapes,
        grid=(n_blocks,),
        in_specs=[
            pl.BlockSpec((tile_b, D), lambda i: (i, 0)),         # x tile
            pl.BlockSpec((D, A_pad), lambda i: (0, 0),
                         pipeline_mode=pl.Buffered(1)),          # weight, resident
            pl.BlockSpec((1, A_pad), lambda i: (0, 0),
                         pipeline_mode=pl.Buffered(1)),          # bias, resident
        ],
        out_specs=(
            pl.BlockSpec((tile_b, A_pad), lambda i: (i, 0)),
            pl.BlockSpec((tile_b, A_pad), lambda i: (i, 0)),
            pl.BlockSpec((tile_b, 1), lambda i: (i, 0)),
        ),
        compiler_params=pltpu.CompilerParams(
            dimension_semantics=("parallel",),
            vmem_limit_bytes=vmem_limit),
        cost_estimate=cost,
    )(x, wt_bf16, bias_padded)

    return probs, logp, mode


# ------------------------ CustomFixedCategorical ---------------------------

class CustomFixedCategoricalJax:
    """JAX mirror of CustomFixedCategorical built from padded kernel outputs.

    Keeps the padded (b_pad, A_pad) kernel outputs and only slices lazily when
    a caller truly needs (B, A) arrays; padded columns have prob==0 /
    logp~=-1e9, so sample/mode/log_probs are unaffected by them.
    """

    def __init__(self, probs_padded, logp_padded, mode_padded, batch, num_outputs):
        self._probs = probs_padded      # (b_pad, A_pad) bf16
        self._logp = logp_padded        # (b_pad, A_pad) f32 exact log-softmax
        self._mode = mode_padded        # (b_pad, 1) int32
        self._B = batch
        self._A = num_outputs

    # torch.distributions.Categorical normalizes .logits to the log-softmax,
    # so the kernel's log_probs *is* the faithful ".logits".
    @property
    def logits(self):
        return self._logp[:self._B, :self._A]

    @property
    def probs(self):
        return self.get_probs()

    def sample(self, key):
        s = jax.random.categorical(key, self._logp, axis=-1)      # padded cols p=0
        return s[:self._B, None]                                  # (B, 1)

    def log_probs(self, actions):
        n = actions.shape[0]
        a = jnp.squeeze(actions, axis=-1)                         # (B,)
        lp = jnp.take_along_axis(self._logp[:n], a[:, None], axis=-1)
        return lp.reshape(n, -1).sum(-1)[:, None]                 # (B, 1)

    def mode(self):
        return self._mode[:self._B]                               # fused argmax

    def get_probs(self):
        # Lazy slice + f32 cast only when a caller actually wants (B, A).
        return self._probs[:self._B, :self._A].astype(jnp.float32)

    def get_log_probs(self):
        # Exact log-softmax from the kernel. Torch computes log(probs + 1e-7);
        # the difference only matters for near-zero probabilities.
        return self._logp[:self._B, :self._A]


# --------------------------- parameter init --------------------------------

def orthogonal_init(key, shape, gain=0.01):
    """Deterministic orthogonal init (matches nn.init.orthogonal_ semantics)."""
    rows, cols = shape
    n, m = max(rows, cols), min(rows, cols)
    a = jax.random.normal(key, (n, m), dtype=jnp.float32)
    q, r = jnp.linalg.qr(a)
    q = q * jnp.sign(jnp.diagonal(r))        # make decomposition unique
    if rows < cols:
        q = q.T
    return gain * q[:rows, :cols]


class CategoricalNetJax:
    """JAX/Pallas equivalent of CategoricalNet."""

    def __init__(self, num_inputs, num_outputs, key):
        self.num_outputs = num_outputs
        w = orthogonal_init(key, (num_outputs, num_inputs), gain=0.01)
        self.weight = w                                   # f32 (A, D) reference copy
        # Minimum lane-dense output width (do NOT pad to 256: kernel is
        # store-bound, not MXU-bound).
        a_pad = 128 * pl.cdiv(num_outputs, 128)
        # Pre-transpose + pad once; store bf16 for MXU / halved weight DMA.
        wt = jnp.zeros((num_inputs, a_pad), jnp.float32)
        wt = wt.at[:, :num_outputs].set(w.T)
        self.wt_bf16 = wt.astype(jnp.bfloat16)
        # Bias = 0 for real columns (matches constant_(0)); -1e9 kills padding.
        self.bias_padded = jnp.full((1, a_pad), -1e9, dtype=jnp.float32)
        self.bias_padded = self.bias_padded.at[:, :num_outputs].set(0.0)

    def __call__(self, x):
        probs_p, logp_p, mode_p = categorical_net_forward(
            x, self.wt_bf16, self.bias_padded)
        return CustomFixedCategoricalJax(
            probs_p, logp_p, mode_p, x.shape[0], self.num_outputs)


# --------------------------------- main -------------------------------------

if __name__ == "__main__":
    key = jax.random.PRNGKey(0)
    k_w, k_x, k_s = jax.random.split(key, 3)

    batch, num_inputs, num_outputs = 8, 32, 16
    net = CategoricalNetJax(num_inputs, num_outputs, k_w)
    x = jax.random.normal(k_x, (batch, num_inputs), dtype=jnp.float32)

    dist = net(x)
    probs = jax.block_until_ready(dist.get_probs())
    logp = jax.block_until_ready(dist.get_log_probs())
    mode = jax.block_until_ready(dist.mode())
    sample = jax.block_until_ready(dist.sample(k_s))
    alp = jax.block_until_ready(dist.log_probs(sample))

    # Pure-JAX f32 reference of the same forward pass (bias == 0).
    ref_logits = x @ net.weight.T
    ref_probs = jax.nn.softmax(ref_logits, axis=-1)
    ref_logp = jax.nn.log_softmax(ref_logits, axis=-1)

    assert probs.shape == (batch, num_outputs)
    assert logp.shape == (batch, num_outputs)
    assert mode.shape == (batch, 1) and sample.shape == (batch, 1)
    assert alp.shape == (batch, 1)
    # Tolerances account for bf16 MXU operands, bf16-stored probs and the
    # approximate EUP reciprocal (~2^-12).
    assert jnp.allclose(probs, ref_probs, atol=5e-3)
    assert jnp.allclose(logp, ref_logp, atol=5e-3)
    assert jnp.allclose(jnp.sum(probs, axis=-1), 1.0, atol=1e-2)
    assert jnp.array_equal(mode, jnp.argmax(ref_probs, axis=-1, keepdims=True))
    assert jnp.all((sample >= 0) & (sample < num_outputs))

    print("KERNEL_OK")
</pallas_src>

<mosaic_0001>
module attributes {stable_mosaic.version = 11 : i64} {
  func.func @_categorical_net_kernel(%arg0: i32, %arg1: memref<8x32xf32, #tpu.memory_space<vmem>>, %arg2: memref<32x128xbf16, #tpu.memory_space<vmem>>, %arg3: memref<1x128xf32, #tpu.memory_space<vmem>>, %arg4: memref<8x128xbf16, #tpu.memory_space<vmem>>, %arg5: memref<8x128xf32, #tpu.memory_space<vmem>>, %arg6: memref<8x1xi32, #tpu.memory_space<vmem>>) attributes {dimension_semantics = [#tpu.dimension_semantics<parallel>], iteration_bounds = array<i64: 1>, scalar_prefetch = 0 : i64, scratch_operands = 0 : i64, tpu.core_type = #tpu.core_type<tc>, window_params = [{transform_indices = @transform_0, window_bounds = array<i64: 8, 32>}, {pipeline_mode = #tpu.pipeline_mode<synchronous>, transform_indices = @transform_1, window_bounds = array<i64: 32, 128>}, {pipeline_mode = #tpu.pipeline_mode<synchronous>, transform_indices = @transform_2, window_bounds = array<i64: 1, 128>}, {transform_indices = @transform_3, window_bounds = array<i64: 8, 128>}, {transform_indices = @transform_4, window_bounds = array<i64: 8, 128>}, {transform_indices = @transform_5, window_bounds = array<i64: 8, 1>}]} {
    %c0 = arith.constant 0 : index
    %c0_0 = arith.constant 0 : index
    %0 = vector.load %arg1[%c0, %c0_0] : memref<8x32xf32, #tpu.memory_space<vmem>>, vector<8x32xf32>
    %1 = arith.truncf %0 : vector<8x32xf32> to vector<8x32xbf16>
    %c0_1 = arith.constant 0 : index
    %c0_2 = arith.constant 0 : index
    %2 = vector.load %arg2[%c0_1, %c0_2] : memref<32x128xbf16, #tpu.memory_space<vmem>>, vector<32x128xbf16>
    %cst = arith.constant dense<0.000000e+00> : vector<8x128xf32>
    %3 = tpu.matmul %1, %2, %cst {dimension_numbers = #tpu.dot_dimension_numbers<[1], [0], [0], [1], [0, 0, 1, 1], [], []>} : vector<8x32xbf16>, vector<32x128xbf16>, vector<8x128xf32> -> vector<8x128xf32>
    %c0_3 = arith.constant 0 : index
    %c0_4 = arith.constant 0 : index
    %4 = vector.load %arg3[%c0_3, %c0_4] : memref<1x128xf32, #tpu.memory_space<vmem>>, vector<1x128xf32>
    %5 = vector.broadcast %4 : vector<1x128xf32> to vector<8x128xf32>
    %6 = arith.addf %3, %5 : vector<8x128xf32>
    %cst_5 = arith.constant dense<0xFF800000> : vector<8xf32>
    %7 = vector.multi_reduction <maximumf>, %6, %cst_5 [1] : vector<8x128xf32> to vector<8xf32>
    %8 = vector.shape_cast %7 : vector<8xf32> to vector<8x1xf32>
    %9 = vector.broadcast %8 : vector<8x1xf32> to vector<8x128xf32>
    %10 = arith.subf %6, %9 : vector<8x128xf32>
    %11 = math.exp %10 : vector<8x128xf32>
    %cst_6 = arith.constant dense<0.000000e+00> : vector<8xf32>
    %12 = vector.multi_reduction <add>, %11, %cst_6 [1] : vector<8x128xf32> to vector<8xf32>
    %13 = vector.shape_cast %12 : vector<8xf32> to vector<8x1xf32>
    %14 = math.log %13 : vector<8x1xf32>
    %15 = vector.broadcast %14 : vector<8x1xf32> to vector<8x128xf32>
    %16 = arith.subf %10, %15 : vector<8x128xf32>
    %c0_7 = arith.constant 0 : index
    %c0_8 = arith.constant 0 : index
    %17 = vector.load %arg5[%c0_7, %c0_8] : memref<8x128xf32, #tpu.memory_space<vmem>>, vector<8x128xf32>
    tpu.vector_store %arg5[%c0_7, %c0_8], %16 {strides = array<i32>} : memref<8x128xf32, #tpu.memory_space<vmem>>, vector<8x128xf32>,
    %18 = tpu.reciprocal %13 {approx = true} : vector<8x1xf32> -> vector<8x1xf32>
    %19 = vector.broadcast %18 : vector<8x1xf32> to vector<8x128xf32>
    %20 = arith.mulf %11, %19 : vector<8x128xf32>
    %21 = arith.truncf %20 : vector<8x128xf32> to vector<8x128xbf16>
    %c0_9 = arith.constant 0 : index
    %c0_10 = arith.constant 0 : index
    %22 = vector.load %arg4[%c0_9, %c0_10] : memref<8x128xbf16, #tpu.memory_space<vmem>>, vector<8x128xbf16>
    tpu.vector_store %arg4[%c0_9, %c0_10], %21 {strides = array<i32>} : memref<8x128xbf16, #tpu.memory_space<vmem>>, vector<8x128xbf16>,
    %23 = tpu.iota {dimensions = array<i32: 1>} : vector<8x128xi32>
    %24 = vector.broadcast %8 : vector<8x1xf32> to vector<8x128xf32>
    %25 = arith.cmpf oeq, %6, %24 : vector<8x128xf32>
    %c128_i32 = arith.constant 128 : i32
    %26 = vector.broadcast %c128_i32 : i32 to vector<8x128xi32>
    %27 = arith.select %25, %23, %26 : vector<8x128xi1>, vector<8x128xi32>
    %cst_11 = arith.constant dense<2147483647> : vector<8xi32>
    %28 = vector.multi_reduction <minsi>, %27, %cst_11 [1] : vector<8x128xi32> to vector<8xi32>
    %29 = vector.shape_cast %28 : vector<8xi32> to vector<8x1xi32>
    %c0_12 = arith.constant 0 : index
    %c0_13 = arith.constant 0 : index
    %30 = vector.load %arg6[%c0_12, %c0_13] : memref<8x1xi32, #tpu.memory_space<vmem>>, vector<8x1xi32>
    tpu.vector_store %arg6[%c0_12, %c0_13], %29 {strides = array<i32>} : memref<8x1xi32, #tpu.memory_space<vmem>>, vector<8x1xi32>,
    return
  }
  func.func @transform_0(%arg0: i32) -> (i32, i32) {
    %c0_i32 = arith.constant 0 : i32
    %c0_i32_0 = arith.constant 0 : i32
    return %arg0, %c0_i32 : i32, i32
  }
  func.func @transform_1(%arg0: i32) -> (i32, i32) {
    %c0_i32 = arith.constant 0 : i32
    %c0_i32_0 = arith.constant 0 : i32
    %c0_i32_1 = arith.constant 0 : i32
    return %c0_i32, %c0_i32_0 : i32, i32
  }
  func.func @transform_2(%arg0: i32) -> (i32, i32) {
    %c0_i32 = arith.constant 0 : i32
    %c0_i32_0 = arith.constant 0 : i32
    %c0_i32_1 = arith.constant 0 : i32
    return %c0_i32, %c0_i32_0 : i32, i32
  }
  func.func @transform_3(%arg0: i32) -> (i32, i32) {
    %c0_i32 = arith.constant 0 : i32
    %c0_i32_0 = arith.constant 0 : i32
    return %arg0, %c0_i32 : i32, i32
  }
  func.func @transform_4(%arg0: i32) -> (i32, i32) {
    %c0_i32 = arith.constant 0 : i32
    %c0_i32_0 = arith.constant 0 : i32
    return %arg0, %c0_i32 : i32, i32
  }
  func.func @transform_5(%arg0: i32) -> (i32, i32) {
    %c0_i32 = arith.constant 0 : i32
    %c0_i32_0 = arith.constant 0 : i32
    return %arg0, %c0_i32 : i32, i32
  }
}

</mosaic_0001>

<llo_original>
// kernel: tpu_custom_call.1
$region0: #{tpu_custom_call.1}
  #allocation0 [shape = 'u32[]', space=smem, size = 0x4, offset = 0x4, fixed_abs, tag = 'smem constant byte address 0x4 - core index']
  #allocation1 [shape = 'u32[144,128]{1,0:T(1,128)}', space=vmem, size = 0x12000, scoped, tag = 'internal scratch']
  %s0 = inlined_call_operand.hbm [shape: f32[8,32], index: 0, kind: input, shape index: {}]
  %s1 = inlined_call_operand.hbm [shape: bf16[32,128], index: 1, kind: input, shape index: {}]
  %s2 = inlined_call_operand.vmem [shape: f32[1,128], index: 2, kind: input, shape index: {}]
  %s3 = inlined_call_operand.hbm [shape: bf16[8,128], index: 3, kind: output, shape index: {0}]
  %s4 = inlined_call_operand.hbm [shape: f32[8,128], index: 4, kind: output, shape index: {1}]
  %s5 = inlined_call_operand.vmem [shape: s32[8,1], index: 5, kind: output, shape index: {2}]
  %6 = xla_tuple %s3, %s4, %s5
  %s7 = sld [smem:[#allocation0]]
  $region46: #{tpu_custom_call.1} parent=0
    _
  %s9 = ssub.s32 1, %s7
  %s10 = scalar_select 0, %s9, %s7
  $region1: #{tpu_custom_call.1} parent=0
    #allocation2 [shape = 'u8[4096]{0}', space=vmem, size = 0x1000, scoped, tag = 'input window, operand 0, single buffered']
    #allocation3 [shape = 's32[1]{0}', space=sflag, size = 0x4, scoped, tag = 'scoped memory for tpu_custom_call.1']
    #allocation4 [shape = 's32[1]{0}', space=sflag, size = 0x4, scoped, tag = 'scoped memory for tpu_custom_call.1']
    #allocation5 [shape = 'u8[8192]{0}', space=vmem, size = 0x2000, scoped, tag = 'input window, operand 1, single buffered']
    #allocation6 [shape = 's32[1]{0}', space=sflag, size = 0x4, scoped, tag = 'scoped memory for tpu_custom_call.1']
    #allocation7 [shape = 'u8[2048]{0}', space=vmem, size = 0x800, scoped, tag = 'output window, operand 0, single buffered']
    #allocation8 [shape = 'u8[4096]{0}', space=vmem, size = 0x1000, scoped, tag = 'output window, operand 1, single buffered']
    #allocation9 [shape = 's32[1]{0}', space=sflag, size = 0x4, scoped, tag = 'scoped memory for tpu_custom_call.1']
    %11 = vsyncpa [#allocation3], 0
    %12 = vsyncpa [#allocation6], 0
    %13 = vsyncpa [#allocation4], 0
    %14 = vsyncpa [#allocation9], 0
    // Predicated region
    $region2: #{tpu_custom_call.1} parent=1 // pred_check
      _
    $region3: #{tpu_custom_call.1} parent=1 // pred_check_branch
      %16 = sbr.rel (0) target = $region5
    $region4: #{tpu_custom_call.1} parent=1 // pred_region
      %s18 = ssub.s32 128, 128
      %19 = vsyncadd [#allocation3], %s18
      %s21 = sshll.u32 [#allocation2], 4
      %s22 = int_to_ptr.vmem [resolvable:$true] %s21
      %24 = dma.hbm_to_vmem [thread:$0]  %s0, 128, %s22, [#allocation3]
    $region5: #{tpu_custom_call.1} parent=1 // pred_fallthru
      _
    // Predicated region
    $region6: #{tpu_custom_call.1} parent=1 // pred_check
      _
    $region7: #{tpu_custom_call.1} parent=1 // pred_check_branch
      %26 = sbr.rel (0) target = $region9
    $region8: #{tpu_custom_call.1} parent=1 // pred_region
      %s28 = ssub.s32 256, 256
      %29 = vsyncadd [#allocation6], %s28
      %s30 = sshll.u32 [#allocation5], 4
      %s31 = int_to_ptr.vmem [resolvable:$true] %s30
      %36 = dma.hbm_to_vmem [thread:$0]  %s1, 256, %s31, [#allocation6], 64, 64, 4
    $region9: #{tpu_custom_call.1} parent=1 // pred_fallthru
      _
    // Predicated region
    $region10: #{tpu_custom_call.1} parent=1 // pred_check
      _
    $region11: #{tpu_custom_call.1} parent=1 // pred_check_branch
      %38 = sbr.rel (0) target = $region13
    $region12: #{tpu_custom_call.1} parent=1 // pred_region
      _
    $region13: #{tpu_custom_call.1} parent=1 // pred_fallthru
      _
    // Predicated region
    $region14: #{tpu_custom_call.1} parent=1 // pred_check
      _
    $region15: #{tpu_custom_call.1} parent=1 // pred_check_branch
      %40 = sbr.rel (0) target = $region17
    $region16: #{tpu_custom_call.1} parent=1 // pred_region
      %41 = dma.done [#allocation3], 128
    $region17: #{tpu_custom_call.1} parent=1 // pred_fallthru
      _
    // Predicated region
    $region18: #{tpu_custom_call.1} parent=1 // pred_check
      _
    $region19: #{tpu_custom_call.1} parent=1 // pred_check_branch
      %43 = sbr.rel (0) target = $region21
    $region20: #{tpu_custom_call.1} parent=1 // pred_region
      %44 = dma.done [#allocation6], 256
    $region21: #{tpu_custom_call.1} parent=1 // pred_fallthru
      _
    %v46 = vld [vmem:[#allocation2] sm:$0xff]
    %v47 = vpack.c.bf16 %v46, %v46
    %v48 = vld [vmem:[#allocation5] sm:$0xf]
    %v49 = vld [vmem:[#allocation5 + $0x4] sm:$0xf]
    %v50 = vld [vmem:[#allocation5 + $0x8] sm:$0xf]
    %v51 = vld [vmem:[#allocation5 + $0xc] sm:$0xf]
    %v52 = vld [vmem:[%s2] sm:$0x1]
    %v54 = vlaneseq
    %v55 = vshrl.u32 %v54, 7
    %v56 = vsub.s32 0, %v55
    %v57 = vrot.slane %v52, %v56
    %v63 = vunpack.c.l.b16 %v48
    %v64 = vunpack.c.l.b16 %v49
    %v65 = vunpack.c.l.b16 %v50
    %v66 = vunpack.c.l.b16 %v51
    %v67 = vpack.c.b16 %v64, %v63
    %v68 = vpack.c.b16 %v66, %v65
    %vm71 = vcmask 261120
    %v73 = vsel %vm71, %v47, 0
    %75 = vmatprep.subr.bf16.mxu0 0
    %76 = vmatpush1.bf16.msra.mxu0 %v67
    %77 = vmatprep.subr.bf16.mxu0 0
    %78 = vmatpush1.bf16.msra.mxu0 %v68
    %79 = vmatprep.subr.bf16.mxu0 0
    %80 = vmatpush1.bf16.msra.mxu0 0
    %81 = vmatprep.subr.bf16.mxu0 0
    %82 = vmatpush1.bf16.msra.mxu0 0
    %83 = vmatprep.subr.bf16.mxu0 0
    %84 = vmatpush1.bf16.msra.mxu0 0
    %85 = vmatprep.subr.bf16.mxu0 0
    %86 = vmatpush1.bf16.msra.mxu0 0
    %87 = vmatprep.subr.bf16.mxu0 0
    %88 = vmatpush1.bf16.msra.mxu0 0
    %89 = vmatprep.subr.bf16.mxu0 0
    %90 = vmatpush1.bf16.msra.mxu0 0
    %91 = vmatprep.subr.bf16.mxu0 0
    %92 = vmatpush1.bf16.msra.mxu0 0
    %93 = vmatprep.subr.bf16.mxu0 0
    %94 = vmatpush1.bf16.msra.mxu0 0
    %95 = vmatprep.subr.bf16.mxu0 0
    %96 = vmatpush1.bf16.msra.mxu0 0
    %97 = vmatprep.subr.bf16.mxu0 0
    %98 = vmatpush1.bf16.msra.mxu0 0
    %99 = vmatprep.subr.bf16.mxu0 0
    %100 = vmatpush1.bf16.msra.mxu0 0
    %101 = vmatprep.subr.bf16.mxu0 0
    %102 = vmatpush1.bf16.msra.mxu0 0
    %103 = vmatprep.subr.bf16.mxu0 0
    %104 = vmatpush1.bf16.msra.mxu0 0
    %105 = vmatprep.subr.bf16.mxu0 0
    %106 = vmatpush1.bf16.msra.mxu0 0
    %107 = vmatprep.mubr.bf16.mxu0 0
    %108 = vmatmul.mubr.bf16.gmra.mrb[0].mxu0 %v73
    %v109 = vpop.f32.mrb[0].mxu0
    %v110 = vadd.f32 %v57, %v109
    %v111 = vpop.f32.mrb[0].mxu0
    %v112 = vpop.f32.mrb[0].mxu0
    %v113 = vpop.f32.mrb[0].mxu0
    %114 = vdwg.mxu0
    %115 = vmax.xlane.f32.xlu0 %v110
    %v116 = vpop.xlane.xlu0 %115
    %v117 = vsub.f32 %v110, %v116
    %v118 = vmul.f32 %v117, 1.442695
    %v119 = vpow.pop %v118
    %120 = vadd.xlane.f32.xlu0 %v119
    %v121 = vpop.xlane.xlu0 %120
    %v122 = vlog2.pop %v121
    %v123 = vmul.f32 %v122, 0.6931472
    %v124 = vsub.f32 %v117, %v123
    %125 = vst [vmem:[#allocation8] sm:$0xff] %v124
    %v126 = vrcp.pop %v121
    %v127 = vmul.f32 %v119, %v126
    %v128 = vpack.c.bf16 %v127, %v127
    %129 = vst [vmem:[#allocation7] sm:$0xf] %v128
    %v130 = vlaneseq
    %v131 = vand.u32 %v130, 127
    %vm132 = vcmp.eq.f32.partialorder %v110, %v116
    %v133 = vsel %vm132, %v131, 128
    %v134 = vand.u32 %v133, 65535
    %v135 = vshra.s32 %v133, 16
    %v136 = vcvt.s32.f32 %v134
    %v137 = vcvt.s32.f32 %v135
    %138 = vmin.xlane.f32.xlu0 %v137
    %v139 = vpop.xlane.xlu0 %138
    %vm140 = vcmp.eq.f32.partialorder %v137, %v139
    %v141 = vsel %vm140, %v136, inf
    %142 = vmin.xlane.f32.xlu0 %v141
    %v143 = vpop.xlane.xlu0 %142
    %v144 = vcvt.f32.s32 %v143
    %v145 = vcvt.f32.s32 %v139
    %v146 = vshll.u32 %v145, 16
    %v147 = vadd.s32 %v146, %v144
    %vm148 = vcmask 7168
    %149 = vst.msk [vmem:[%s5] sm:$0xff] %vm148, %v147
    // Predicated region
    $region22: #{tpu_custom_call.1} parent=1 // pred_check
      _
    $region23: #{tpu_custom_call.1} parent=1 // pred_check_branch
      %151 = sbr.rel (0) target = $region25
    $region24: #{tpu_custom_call.1} parent=1 // pred_region
      %s153 = ssub.s32 64, 64
      %154 = vsyncadd [#allocation4], %s153
      %s156 = sshll.u32 [#allocation7], 4
      %s157 = int_to_ptr.vmem [resolvable:$true] %s156
      %159 = dma.vmem_to_hbm [thread:$0]  %s157, 64, %s3, [#allocation4]
    $region25: #{tpu_custom_call.1} parent=1 // pred_fallthru
      _
    // Predicated region
    $region26: #{tpu_custom_call.1} parent=1 // pred_check
      _
    $region27: #{tpu_custom_call.1} parent=1 // pred_check_branch
      %161 = sbr.rel (0) target = $region29
    $region28: #{tpu_custom_call.1} parent=1 // pred_region
      %s163 = ssub.s32 128, 128
      %164 = vsyncadd [#allocation9], %s163
      %s166 = sshll.u32 [#allocation8], 4
      %s167 = int_to_ptr.vmem [resolvable:$true] %s166
      %169 = dma.vmem_to_hbm [thread:$0]  %s167, 128, %s4, [#allocation9]
    $region29: #{tpu_custom_call.1} parent=1 // pred_fallthru
      _
    // Predicated region
    $region30: #{tpu_custom_call.1} parent=1 // pred_check
      _
    $region31: #{tpu_custom_call.1} parent=1 // pred_check_branch
      %171 = sbr.rel (0) target = $region33
    $region32: #{tpu_custom_call.1} parent=1 // pred_region
      _
    $region33: #{tpu_custom_call.1} parent=1 // pred_fallthru
      _
    // Predicated region
    $region34: #{tpu_custom_call.1} parent=1 // pred_check
      _
    $region35: #{tpu_custom_call.1} parent=1 // pred_check_branch
      %173 = sbr.rel (0) target = $region37
    $region36: #{tpu_custom_call.1} parent=1 // pred_region
      %174 = dma.done [#allocation4], 64
    $region37: #{tpu_custom_call.1} parent=1 // pred_fallthru
      _
    // Predicated region
    $region38: #{tpu_custom_call.1} parent=1 // pred_check
      _
    $region39: #{tpu_custom_call.1} parent=1 // pred_check_branch
      %176 = sbr.rel (0) target = $region41
    $region40: #{tpu_custom_call.1} parent=1 // pred_region
      %177 = dma.done [#allocation9], 128
    $region41: #{tpu_custom_call.1} parent=1 // pred_fallthru
      _
    // Predicated region
    $region42: #{tpu_custom_call.1} parent=1 // pred_check
      _
    $region43: #{tpu_custom_call.1} parent=1 // pred_check_branch
      %179 = sbr.rel (0) target = $region45
    $region44: #{tpu_custom_call.1} parent=1 // pred_region
      _
    $region45: #{tpu_custom_call.1} parent=1 // pred_fallthru
      _
    %180 = vsyncpa [#allocation3], 1
    %181 = vsyncpa [#allocation6], 1
    %182 = vsyncpa [#allocation4], 1
    %183 = vsyncpa [#allocation9], 1

</llo_original>
